<compile_context>
chip_gen: v7x
topology: tpu7x:2x2x1
jax: 0.10.0
libtpu: 0.0.40
codegen_flags: <defaults>
</compile_context>

<pallas_src>
import functools
import itertools

import numpy as np
import jax
import jax.numpy as jnp
from jax.experimental import pallas as pl
from jax.experimental.pallas import tpu as pltpu

try:  # host-side Hungarian solver (sequential algorithm, no Pallas equivalent)
    from scipy.optimize import linear_sum_assignment as _scipy_lsa
except Exception:  # pragma: no cover - scipy not installed in sandbox
    _scipy_lsa = None


_TILE_VMEM_BUDGET = 16 * 1024 * 1024   # budget for the streamed, double-buffered tiles
_VMEM_LIMIT_BYTES = 32 * 1024 * 1024   # <= scoped defaults on v6e/v7x, raises v5e's 16 MiB
_TM_MAX = 2048                         # row-tile cap
_EPS = 1e-12                           # guards approx reciprocal against zero-area boxes


def _round_up(x, m):
    return ((x + m - 1) // m) * m


def _cdiv(a, b):
    return -(-a // b)


def _choose_row_tiling(M, C, T_pad):
    """Pick (TM, M_pad): choose the number of row tiles first, then tile height."""
    # double-buffered f32 bytes streamed per row: logits (C) + bboxes (4) + cost (T_pad)
    row_bytes = 2 * 4 * (C + 4 + T_pad)
    tm_cap = max(8, min(_TM_MAX, (_TILE_VMEM_BUDGET // row_bytes) // 8 * 8))
    n_tiles = max(1, _cdiv(M, tm_cap))
    if M > 8:
        n_tiles = max(n_tiles, 2)       # >= 2 tiles so v7x megacore engages
    if n_tiles > 1 and n_tiles % 2:
        n_tiles += 1                    # even tile count balances the two TensorCores
    tm = _round_up(_cdiv(M, n_tiles), 8)
    return tm, tm * n_tiles


def _cost_kernel(bb_ref, logits_ref, onehot_ref, tslab_ref, cost_ref,
                 *, const, ll, lb, lg):
    # ---- softmax, normalized (and ll-scaled) on the narrow (TM, C) side -----
    logits = logits_ref[...]                                     # (TM, C) f32
    m = jnp.max(logits, axis=-1, keepdims=True)
    e = jnp.exp(logits - m)
    inv_sum = pl.reciprocal(jnp.sum(e, axis=-1, keepdims=True), approx=True)
    e_norm = e * (inv_sum * ll)                                  # ll * softmax, (TM, C)

    # ---- ll * probs[:, tgt_labels] via bf16 one-hot gather on the MXU -------
    p_ll = jnp.dot(e_norm.astype(jnp.bfloat16), onehot_ref[...],
                   preferred_element_type=jnp.float32)           # (TM, T)

    # running accumulator: keeps only a couple of (TM, T) temporaries live.
    # cost = (ll + 2*lg) - ll*p + lb*l1 - lg*(iou + union/earea)
    cost = const - p_ll

    # ---- L1 cost (cdist p=1), lamb_bboxes pre-folded into both operands -----
    ob = bb_ref[...]                                             # (TM, 4) f32
    ob_l = ob * lb if lb != 1.0 else ob                          # O(TM) scaling
    ts = tslab_ref[...]                                          # (9, T) f32
    # rows 0..3 of tslab are lb * (cx, cy, w, h), scaled once in the wrapper
    cost = cost + (jnp.abs(ob_l[:, 0:1] - ts[0:1, :])
                   + jnp.abs(ob_l[:, 1:2] - ts[1:2, :])
                   + jnp.abs(ob_l[:, 2:3] - ts[2:3, :])
                   + jnp.abs(ob_l[:, 3:4] - ts[3:4, :]))

    # ---- per-query bbox coordinates (cxcywh -> xyxy), cheap (TM, 1) columns --
    ocx, ocy, ow, oh = ob[:, 0:1], ob[:, 1:2], ob[:, 2:3], ob[:, 3:4]
    ox0, oy0 = ocx - 0.5 * ow, ocy - 0.5 * oh
    ox1, oy1 = ocx + 0.5 * ow, ocy + 0.5 * oh
    area_o = ow * oh                                             # (TM, 1)

    # ---- target-side slab (precomputed in wrapper), (1, T) rows --------------
    tx0, ty0, tx1, ty1 = ts[4:5, :], ts[5:6, :], ts[6:7, :], ts[7:8, :]
    area_t = ts[8:9, :]

    # ---- generalized IoU ------------------------------------------------------
    iw = jnp.maximum(jnp.minimum(ox1, tx1) - jnp.maximum(ox0, tx0), 0.0)
    ih = jnp.maximum(jnp.minimum(oy1, ty1) - jnp.maximum(oy0, ty0), 0.0)
    inter = iw * ih                                              # (TM, T)
    union = (area_o + area_t) - inter
    # enclosing-box extents are non-negative for cxcywh boxes with w,h >= 0
    ew = jnp.maximum(ox1, tx1) - jnp.minimum(ox0, tx0)
    eh = jnp.maximum(oy1, ty1) - jnp.minimum(oy0, ty0)
    earea = ew * eh

    # giou = iou - (earea - union)/earea = iou - 1 + union/earea; the "-1" is
    # already folded into `const`, so only (iou + union/earea) is needed here.
    inv_union = pl.reciprocal(jnp.maximum(union, _EPS), approx=True)
    inv_earea = pl.reciprocal(jnp.maximum(earea, _EPS), approx=True)
    s = inter * inv_union + union * inv_earea
    if lg != 1.0:
        s = lg * s
    cost_ref[...] = cost - s


def compute_cost_matrix(out_labels, out_bboxes, tgt_labels, tgt_bboxes,
                        ll=1.0, lb=1.0, lg=1.0):
    """Returns the (B, N, T) matching cost matrix."""
    B, N, C = out_labels.shape
    M = B * N
    T = int(tgt_labels.shape[0])

    ll, lb, lg = float(ll), float(lb), float(lg)
    # NOTE: lamb_bboxes is folded into the L1 operands (O(M + T) scaling instead
    # of a full (M, T) multiply); this assumes lamb_bboxes >= 0 as in DETR.

    # ---- column (target) padding to lane-dense width -------------------------
    T_pad = _round_up(max(T, 1), 128)
    # ---- row (query) tiling: #tiles first, then tile height -------------------
    TM, M_pad = _choose_row_tiling(M, C, T_pad)

    labels_flat = out_labels.reshape(M, C).astype(jnp.float32)
    bboxes_flat = out_bboxes.reshape(M, 4).astype(jnp.float32)
    if M_pad > M:
        labels_flat = jnp.concatenate(
            [labels_flat, jnp.zeros((M_pad - M, C), jnp.float32)], axis=0)
        bboxes_flat = jnp.concatenate(
            [bboxes_flat, jnp.full((M_pad - M, 4), 0.5, jnp.float32)], axis=0)

    tgt_lab = tgt_labels.astype(jnp.int32)
    tgt_bb = tgt_bboxes.astype(jnp.float32)
    if T_pad > T:
        # pad targets with an out-of-range class id and valid dummy boxes
        tgt_lab = jnp.concatenate(
            [tgt_lab, jnp.full((T_pad - T,), C, jnp.int32)])
        tgt_bb = jnp.concatenate(
            [tgt_bb, jnp.full((T_pad - T, 4), 0.5, jnp.float32)], axis=0)

    # one-hot gather matrix in bf16 (exact {0,1}); lamb_labels is folded into
    # the softmax normalization inside the kernel instead.
    class_ids = jnp.arange(C, dtype=jnp.int32)[:, None]           # (C, 1)
    onehot = (class_ids == tgt_lab[None, :]).astype(jnp.bfloat16)  # (C, T_pad)

    # target-side derived slab: rows 0..3 lb-scaled cxcywh, 4..7 xyxy, 8 area
    tcx, tcy, tw, th = tgt_bb[:, 0], tgt_bb[:, 1], tgt_bb[:, 2], tgt_bb[:, 3]
    tx0, ty0 = tcx - 0.5 * tw, tcy - 0.5 * th
    tx1, ty1 = tcx + 0.5 * tw, tcy + 0.5 * th
    area_t = tw * th
    tslab = jnp.stack([lb * tcx, lb * tcy, lb * tw, lb * th,
                       tx0, ty0, tx1, ty1, area_t], axis=0)       # (9, T_pad)

    kernel = functools.partial(_cost_kernel, const=ll + 2.0 * lg,
                               ll=ll, lb=lb, lg=lg)

    grid = (M_pad // TM,)
    cost = pl.pallas_call(
        kernel,
        out_shape=jax.ShapeDtypeStruct((M_pad, T_pad), jnp.float32),
        grid=grid,
        in_specs=[
            pl.BlockSpec((TM, 4), lambda i: (i, 0)),        # query bboxes
            pl.BlockSpec((TM, C), lambda i: (i, 0)),        # query logits
            # grid-invariant inputs: constant index_map -> re-DMA skipped after
            # step 0; footprint is a few KB, so default buffering is harmless.
            pl.BlockSpec((C, T_pad), lambda i: (0, 0)),     # bf16 one-hot
            pl.BlockSpec((9, T_pad), lambda i: (0, 0)),     # target bbox slab
        ],
        out_specs=pl.BlockSpec((TM, T_pad), lambda i: (i, 0)),
        compiler_params=pltpu.CompilerParams(
            dimension_semantics=("parallel",),              # megacore on v7x
            vmem_limit_bytes=_VMEM_LIMIT_BYTES),
    )(bboxes_flat, labels_flat, onehot, tslab)

    return cost[:M, :T].reshape(B, N, T)


def _linear_sum_assignment_bf(cost):
    # Brute-force fallback (only for tiny problems, n_cols <= n_rows).
    # TODO(synk): the Hungarian algorithm itself is a sequential host-side
    # solver with no Pallas equivalent; scipy is used when available.
    n_rows, n_cols = cost.shape
    assert n_cols <= n_rows, "expects num_queries >= num_targets"
    best_perm, best_cost = None, np.inf
    for perm in itertools.permutations(range(n_rows), n_cols):
        c = sum(cost[perm[j], j] for j in range(n_cols))
        if c < best_cost:
            best_cost, best_perm = c, perm
    rows = np.asarray(best_perm, dtype=np.int64)
    cols = np.arange(n_cols, dtype=np.int64)
    order = np.argsort(rows)
    return rows[order], cols[order]


def _linear_sum_assignment(cost):
    if _scipy_lsa is not None:
        r, c = _scipy_lsa(cost)
        return np.asarray(r, dtype=np.int64), np.asarray(c, dtype=np.int64)
    return _linear_sum_assignment_bf(cost)


def hungarian_matcher(outputs, targets, lamb_labels=1.0, lamb_bboxes=1.0,
                      lamb_geniou=1.0):
    tgt_labels = jnp.concatenate([t['labels'] for t in targets])
    tgt_bboxes = jnp.concatenate([t['bboxes'] for t in targets])

    cost = compute_cost_matrix(outputs['labels'], outputs['bboxes'],
                               tgt_labels, tgt_bboxes,
                               lamb_labels, lamb_bboxes, lamb_geniou)
    cost = jax.block_until_ready(cost)
    cost_np = np.asarray(cost)                                  # (B, N, T)

    num_bboxes = [int(t['bboxes'].shape[0]) for t in targets]
    indices, start = [], 0
    for i, n in enumerate(num_bboxes):
        c_i = cost_np[i, :, start:start + n]
        row, col = _linear_sum_assignment(c_i)
        indices.append((np.asarray(row, dtype=np.int64),
                        np.asarray(col, dtype=np.int64)))
        start += n
    return indices


if __name__ == "__main__":
    key = jax.random.PRNGKey(0)
    B, N, C = 2, 8, 7          # batch, num_queries, num_classes
    k1, k2, k3, k4, k5, k6 = jax.random.split(key, 6)

    outputs = {
        'labels': jax.random.normal(k1, (B, N, C), jnp.float32),
        'bboxes': jax.nn.sigmoid(jax.random.normal(k2, (B, N, 4), jnp.float32)),
    }
    targets = [
        {'labels': jax.random.randint(k3, (3,), 0, C, jnp.int32),
         'bboxes': jax.nn.sigmoid(jax.random.normal(k4, (3, 4), jnp.float32))},
        {'labels': jax.random.randint(k5, (2,), 0, C, jnp.int32),
         'bboxes': jax.nn.sigmoid(jax.random.normal(k6, (2, 4), jnp.float32))},
    ]

    indices = hungarian_matcher(outputs, targets)
    assert len(indices) == B
    for (ri, ci), t in zip(indices, targets):
        assert ri.shape == ci.shape == (t['bboxes'].shape[0],)
        assert ri.dtype == np.int64 and ci.dtype == np.int64
    print("KERNEL_OK")
</pallas_src>

<mosaic_0001>
module attributes {stable_mosaic.version = 11 : i64} {
  func.func @_cost_kernel(%arg0: i32, %arg1: memref<8x4xf32, #tpu.memory_space<vmem>>, %arg2: memref<8x7xf32, #tpu.memory_space<vmem>>, %arg3: memref<7x128xbf16, #tpu.memory_space<vmem>>, %arg4: memref<9x128xf32, #tpu.memory_space<vmem>>, %arg5: memref<8x128xf32, #tpu.memory_space<vmem>>) attributes {dimension_semantics = [#tpu.dimension_semantics<parallel>], iteration_bounds = array<i64: 2>, scalar_prefetch = 0 : i64, scratch_operands = 0 : i64, tpu.core_type = #tpu.core_type<tc>, window_params = [{transform_indices = @transform_0, window_bounds = array<i64: 8, 4>}, {transform_indices = @transform_1, window_bounds = array<i64: 8, 7>}, {pipeline_mode = #tpu.pipeline_mode<synchronous>, transform_indices = @transform_2, window_bounds = array<i64: 7, 128>}, {pipeline_mode = #tpu.pipeline_mode<synchronous>, transform_indices = @transform_3, window_bounds = array<i64: 9, 128>}, {transform_indices = @transform_4, window_bounds = array<i64: 8, 128>}]} {
    %c0 = arith.constant 0 : index
    %c0_0 = arith.constant 0 : index
    %0 = vector.load %arg2[%c0, %c0_0] : memref<8x7xf32, #tpu.memory_space<vmem>>, vector<8x7xf32>
    %cst = arith.constant dense<0xFF800000> : vector<8xf32>
    %1 = vector.multi_reduction <maximumf>, %0, %cst [1] : vector<8x7xf32> to vector<8xf32>
    %2 = vector.shape_cast %1 : vector<8xf32> to vector<8x1xf32>
    %3 = vector.broadcast %2 : vector<8x1xf32> to vector<8x7xf32>
    %4 = arith.subf %0, %3 : vector<8x7xf32>
    %5 = math.exp %4 : vector<8x7xf32>
    %cst_1 = arith.constant dense<0.000000e+00> : vector<8xf32>
    %6 = vector.multi_reduction <add>, %5, %cst_1 [1] : vector<8x7xf32> to vector<8xf32>
    %7 = vector.shape_cast %6 : vector<8xf32> to vector<8x1xf32>
    %8 = tpu.reciprocal %7 {approx = true} : vector<8x1xf32> -> vector<8x1xf32>
    %cst_2 = arith.constant 1.000000e+00 : f32
    %9 = vector.broadcast %cst_2 : f32 to vector<8x1xf32>
    %10 = arith.mulf %8, %9 : vector<8x1xf32>
    %11 = vector.broadcast %10 : vector<8x1xf32> to vector<8x7xf32>
    %12 = arith.mulf %5, %11 : vector<8x7xf32>
    %13 = arith.truncf %12 : vector<8x7xf32> to vector<8x7xbf16>
    %c0_3 = arith.constant 0 : index
    %c0_4 = arith.constant 0 : index
    %14 = vector.load %arg3[%c0_3, %c0_4] : memref<7x128xbf16, #tpu.memory_space<vmem>>, vector<7x128xbf16>
    %cst_5 = arith.constant dense<0.000000e+00> : vector<8x128xf32>
    %15 = tpu.matmul %13, %14, %cst_5 {dimension_numbers = #tpu.dot_dimension_numbers<[1], [0], [0], [1], [0, 0, 1, 1], [], []>} : vector<8x7xbf16>, vector<7x128xbf16>, vector<8x128xf32> -> vector<8x128xf32>
    %cst_6 = arith.constant 3.000000e+00 : f32
    %16 = vector.broadcast %cst_6 : f32 to vector<8x128xf32>
    %17 = arith.subf %16, %15 : vector<8x128xf32>
    %c0_7 = arith.constant 0 : index
    %c0_8 = arith.constant 0 : index
    %18 = vector.load %arg1[%c0_7, %c0_8] : memref<8x4xf32, #tpu.memory_space<vmem>>, vector<8x4xf32>
    %c0_9 = arith.constant 0 : index
    %c0_10 = arith.constant 0 : index
    %19 = vector.load %arg4[%c0_9, %c0_10] : memref<9x128xf32, #tpu.memory_space<vmem>>, vector<9x128xf32>
    %20 = vector.extract_strided_slice %18 {offsets = [0, 0], sizes = [8, 1], strides = [1, 1]} : vector<8x4xf32> to vector<8x1xf32>
    %21 = vector.extract_strided_slice %19 {offsets = [0, 0], sizes = [1, 128], strides = [1, 1]} : vector<9x128xf32> to vector<1x128xf32>
    %22 = vector.broadcast %20 : vector<8x1xf32> to vector<8x128xf32>
    %23 = vector.broadcast %21 : vector<1x128xf32> to vector<8x128xf32>
    %24 = arith.subf %22, %23 : vector<8x128xf32>
    %25 = math.absf %24 : vector<8x128xf32>
    %26 = vector.extract_strided_slice %18 {offsets = [0, 1], sizes = [8, 1], strides = [1, 1]} : vector<8x4xf32> to vector<8x1xf32>
    %27 = vector.extract_strided_slice %19 {offsets = [1, 0], sizes = [1, 128], strides = [1, 1]} : vector<9x128xf32> to vector<1x128xf32>
    %28 = vector.broadcast %26 : vector<8x1xf32> to vector<8x128xf32>
    %29 = vector.broadcast %27 : vector<1x128xf32> to vector<8x128xf32>
    %30 = arith.subf %28, %29 : vector<8x128xf32>
    %31 = math.absf %30 : vector<8x128xf32>
    %32 = arith.addf %25, %31 : vector<8x128xf32>
    %33 = vector.extract_strided_slice %18 {offsets = [0, 2], sizes = [8, 1], strides = [1, 1]} : vector<8x4xf32> to vector<8x1xf32>
    %34 = vector.extract_strided_slice %19 {offsets = [2, 0], sizes = [1, 128], strides = [1, 1]} : vector<9x128xf32> to vector<1x128xf32>
    %35 = vector.broadcast %33 : vector<8x1xf32> to vector<8x128xf32>
    %36 = vector.broadcast %34 : vector<1x128xf32> to vector<8x128xf32>
    %37 = arith.subf %35, %36 : vector<8x128xf32>
    %38 = math.absf %37 : vector<8x128xf32>
    %39 = arith.addf %32, %38 : vector<8x128xf32>
    %40 = vector.extract_strided_slice %18 {offsets = [0, 3], sizes = [8, 1], strides = [1, 1]} : vector<8x4xf32> to vector<8x1xf32>
    %41 = vector.extract_strided_slice %19 {offsets = [3, 0], sizes = [1, 128], strides = [1, 1]} : vector<9x128xf32> to vector<1x128xf32>
    %42 = vector.broadcast %40 : vector<8x1xf32> to vector<8x128xf32>
    %43 = vector.broadcast %41 : vector<1x128xf32> to vector<8x128xf32>
    %44 = arith.subf %42, %43 : vector<8x128xf32>
    %45 = math.absf %44 : vector<8x128xf32>
    %46 = arith.addf %39, %45 : vector<8x128xf32>
    %47 = arith.addf %17, %46 : vector<8x128xf32>
    %48 = vector.extract_strided_slice %18 {offsets = [0, 0], sizes = [8, 1], strides = [1, 1]} : vector<8x4xf32> to vector<8x1xf32>
    %49 = vector.extract_strided_slice %18 {offsets = [0, 1], sizes = [8, 1], strides = [1, 1]} : vector<8x4xf32> to vector<8x1xf32>
    %50 = vector.extract_strided_slice %18 {offsets = [0, 2], sizes = [8, 1], strides = [1, 1]} : vector<8x4xf32> to vector<8x1xf32>
    %51 = vector.extract_strided_slice %18 {offsets = [0, 3], sizes = [8, 1], strides = [1, 1]} : vector<8x4xf32> to vector<8x1xf32>
    %cst_11 = arith.constant 5.000000e-01 : f32
    %52 = vector.broadcast %cst_11 : f32 to vector<8x1xf32>
    %53 = arith.mulf %52, %50 : vector<8x1xf32>
    %54 = arith.subf %48, %53 : vector<8x1xf32>
    %cst_12 = arith.constant 5.000000e-01 : f32
    %55 = vector.broadcast %cst_12 : f32 to vector<8x1xf32>
    %56 = arith.mulf %55, %51 : vector<8x1xf32>
    %57 = arith.subf %49, %56 : vector<8x1xf32>
    %cst_13 = arith.constant 5.000000e-01 : f32
    %58 = vector.broadcast %cst_13 : f32 to vector<8x1xf32>
    %59 = arith.mulf %58, %50 : vector<8x1xf32>
    %60 = arith.addf %48, %59 : vector<8x1xf32>
    %cst_14 = arith.constant 5.000000e-01 : f32
    %61 = vector.broadcast %cst_14 : f32 to vector<8x1xf32>
    %62 = arith.mulf %61, %51 : vector<8x1xf32>
    %63 = arith.addf %49, %62 : vector<8x1xf32>
    %64 = arith.mulf %50, %51 : vector<8x1xf32>
    %65 = vector.extract_strided_slice %19 {offsets = [4, 0], sizes = [1, 128], strides = [1, 1]} : vector<9x128xf32> to vector<1x128xf32>
    %66 = vector.extract_strided_slice %19 {offsets = [5, 0], sizes = [1, 128], strides = [1, 1]} : vector<9x128xf32> to vector<1x128xf32>
    %67 = vector.extract_strided_slice %19 {offsets = [6, 0], sizes = [1, 128], strides = [1, 1]} : vector<9x128xf32> to vector<1x128xf32>
    %68 = vector.extract_strided_slice %19 {offsets = [7, 0], sizes = [1, 128], strides = [1, 1]} : vector<9x128xf32> to vector<1x128xf32>
    %69 = vector.extract_strided_slice %19 {offsets = [8, 0], sizes = [1, 128], strides = [1, 1]} : vector<9x128xf32> to vector<1x128xf32>
    %70 = vector.broadcast %60 : vector<8x1xf32> to vector<8x128xf32>
    %71 = vector.broadcast %67 : vector<1x128xf32> to vector<8x128xf32>
    %72 = arith.minimumf %70, %71 : vector<8x128xf32>
    %73 = vector.broadcast %54 : vector<8x1xf32> to vector<8x128xf32>
    %74 = vector.broadcast %65 : vector<1x128xf32> to vector<8x128xf32>
    %75 = arith.maximumf %73, %74 : vector<8x128xf32>
    %76 = arith.subf %72, %75 : vector<8x128xf32>
    %cst_15 = arith.constant 0.000000e+00 : f32
    %77 = vector.broadcast %cst_15 : f32 to vector<8x128xf32>
    %78 = arith.maximumf %76, %77 : vector<8x128xf32>
    %79 = vector.broadcast %63 : vector<8x1xf32> to vector<8x128xf32>
    %80 = vector.broadcast %68 : vector<1x128xf32> to vector<8x128xf32>
    %81 = arith.minimumf %79, %80 : vector<8x128xf32>
    %82 = vector.broadcast %57 : vector<8x1xf32> to vector<8x128xf32>
    %83 = vector.broadcast %66 : vector<1x128xf32> to vector<8x128xf32>
    %84 = arith.maximumf %82, %83 : vector<8x128xf32>
    %85 = arith.subf %81, %84 : vector<8x128xf32>
    %cst_16 = arith.constant 0.000000e+00 : f32
    %86 = vector.broadcast %cst_16 : f32 to vector<8x128xf32>
    %87 = arith.maximumf %85, %86 : vector<8x128xf32>
    %88 = arith.mulf %78, %87 : vector<8x128xf32>
    %89 = vector.broadcast %64 : vector<8x1xf32> to vector<8x128xf32>
    %90 = vector.broadcast %69 : vector<1x128xf32> to vector<8x128xf32>
    %91 = arith.addf %89, %90 : vector<8x128xf32>
    %92 = arith.subf %91, %88 : vector<8x128xf32>
    %93 = vector.broadcast %60 : vector<8x1xf32> to vector<8x128xf32>
    %94 = vector.broadcast %67 : vector<1x128xf32> to vector<8x128xf32>
    %95 = arith.maximumf %93, %94 : vector<8x128xf32>
    %96 = vector.broadcast %54 : vector<8x1xf32> to vector<8x128xf32>
    %97 = vector.broadcast %65 : vector<1x128xf32> to vector<8x128xf32>
    %98 = arith.minimumf %96, %97 : vector<8x128xf32>
    %99 = arith.subf %95, %98 : vector<8x128xf32>
    %100 = vector.broadcast %63 : vector<8x1xf32> to vector<8x128xf32>
    %101 = vector.broadcast %68 : vector<1x128xf32> to vector<8x128xf32>
    %102 = arith.maximumf %100, %101 : vector<8x128xf32>
    %103 = vector.broadcast %57 : vector<8x1xf32> to vector<8x128xf32>
    %104 = vector.broadcast %66 : vector<1x128xf32> to vector<8x128xf32>
    %105 = arith.minimumf %103, %104 : vector<8x128xf32>
    %106 = arith.subf %102, %105 : vector<8x128xf32>
    %107 = arith.mulf %99, %106 : vector<8x128xf32>
    %cst_17 = arith.constant 9.99999996E-13 : f32
    %108 = vector.broadcast %cst_17 : f32 to vector<8x128xf32>
    %109 = arith.maximumf %92, %108 : vector<8x128xf32>
    %110 = tpu.reciprocal %109 {approx = true} : vector<8x128xf32> -> vector<8x128xf32>
    %cst_18 = arith.constant 9.99999996E-13 : f32
    %111 = vector.broadcast %cst_18 : f32 to vector<8x128xf32>
    %112 = arith.maximumf %107, %111 : vector<8x128xf32>
    %113 = tpu.reciprocal %112 {approx = true} : vector<8x128xf32> -> vector<8x128xf32>
    %114 = arith.mulf %88, %110 : vector<8x128xf32>
    %115 = arith.mulf %92, %113 : vector<8x128xf32>
    %116 = arith.addf %114, %115 : vector<8x128xf32>
    %117 = arith.subf %47, %116 : vector<8x128xf32>
    %c0_19 = arith.constant 0 : index
    %c0_20 = arith.constant 0 : index
    %118 = vector.load %arg5[%c0_19, %c0_20] : memref<8x128xf32, #tpu.memory_space<vmem>>, vector<8x128xf32>
    tpu.vector_store %arg5[%c0_19, %c0_20], %117 {strides = array<i32>} : memref<8x128xf32, #tpu.memory_space<vmem>>, vector<8x128xf32>,
    return
  }
  func.func @transform_0(%arg0: i32) -> (i32, i32) {
    %c0_i32 = arith.constant 0 : i32
    %c0_i32_0 = arith.constant 0 : i32
    return %arg0, %c0_i32 : i32, i32
  }
  func.func @transform_1(%arg0: i32) -> (i32, i32) {
    %c0_i32 = arith.constant 0 : i32
    %c0_i32_0 = arith.constant 0 : i32
    return %arg0, %c0_i32 : i32, i32
  }
  func.func @transform_2(%arg0: i32) -> (i32, i32) {
    %c0_i32 = arith.constant 0 : i32
    %c0_i32_0 = arith.constant 0 : i32
    %c0_i32_1 = arith.constant 0 : i32
    return %c0_i32, %c0_i32_0 : i32, i32
  }
  func.func @transform_3(%arg0: i32) -> (i32, i32) {
    %c0_i32 = arith.constant 0 : i32
    %c0_i32_0 = arith.constant 0 : i32
    %c0_i32_1 = arith.constant 0 : i32
    return %c0_i32, %c0_i32_0 : i32, i32
  }
  func.func @transform_4(%arg0: i32) -> (i32, i32) {
    %c0_i32 = arith.constant 0 : i32
    %c0_i32_0 = arith.constant 0 : i32
    return %arg0, %c0_i32 : i32, i32
  }
}

</mosaic_0001>

<llo_original>
// kernel: tpu_custom_call.1
$region0: #{tpu_custom_call.1}
  #allocation0 [shape = 'u32[]', space=smem, size = 0x4, offset = 0x4, fixed_abs, tag = 'smem constant byte address 0x4 - core index']
  #allocation1 [shape = 'u32[144,128]{1,0:T(1,128)}', space=vmem, size = 0x12000, scoped, tag = 'internal scratch']
  %s0 = inlined_call_operand.vmem [shape: f32[16,4], index: 0, kind: input, shape index: {}]
  %s1 = inlined_call_operand.vmem [shape: f32[16,7], index: 1, kind: input, shape index: {}]
  %s2 = inlined_call_operand.vmem [shape: bf16[7,128], index: 2, kind: input, shape index: {}]
  %s3 = inlined_call_operand.vmem [shape: f32[9,128], index: 3, kind: input, shape index: {}]
  %s4 = inlined_call_operand.hbm [shape: f32[16,128], index: 4, kind: output, shape index: {}]
  %s5 = sld [smem:[#allocation0]]
  $region49: #{tpu_custom_call.1} parent=0
    _
  %s7 = ssub.s32 1, %s5
  %s8 = scalar_select 0, %s7, %s5
  $region1: #{tpu_custom_call.1} parent=0
    #allocation2 [shape = 'u8[8192]{0}', space=vmem, size = 0x2000, scoped, tag = 'output window, operand 0']
    #allocation3 [shape = 's32[2]{0}', space=sflag, size = 0x8, scoped, tag = 'scoped memory for tpu_custom_call.1']
    %9 = vsyncpa [#allocation3], 0
    %s10 = scalar_lea.sflag [#allocation3], 1
    %11 = vsyncpa %s10, 0
    loop: start=0, step=1, limit=4
    $region2: #{tpu_custom_call.1} parent=1 // loop_pre_header
      _
    $region3: #{tpu_custom_call.1} parent=1 // loop_header
      %s13 = sphi 0, %s17
      %p14 = scmp.ge.s32.totalorder %s13, 4
      %s23 = sphi 0, %s25
      %s26 = sphi 0, %s23
      %s27 = sphi 0, %s26
      %s43 = sphi 0, %s27
      %s49 = sphi 0, %s51
      %s52 = sphi 0, %s49
      %s53 = sphi 0, %s52
      %s69 = sphi 0, %s53
      %s73 = sphi 0, %s73
      %s75 = sphi 0, %s73
      %s76 = sphi 0, %s75
      %s90 = sphi 0, %s76
      %s94 = sphi 0, %s94
      %s96 = sphi 0, %s94
      %s97 = sphi 0, %s96
      %s111 = sphi 0, %s97
      %s117 = sphi 0, %s119
      %s120 = sphi 0, %s117
      %s121 = sphi 0, %s120
      %s137 = sphi 0, %s121
    $region4: #{tpu_custom_call.1} parent=1 // loop_header_branch
      %16 = sbr.rel (%p14) target = $region8
    $region5: #{tpu_custom_call.1} parent=1 // loop_body
      %s18 = ssub.s32 %s13, 1
      %s19 = ssub.s32 %s13, 2
      %s20 = sadd.s32 %s13, 1
      %s21 = ssub.s32 %s13, %s20
      %p22 = scmp.eq.s32.totalorder %s21, 0
      %s24 = sadd.s32 %s23, 1
      %s25 = scalar_select %p22, %s23, %s24
      %p28 = pneg %p22
      %p29 = scmp.eq.s32.totalorder %s13, 1
      %p30 = por %p28, %p29
      %p31 = scmp.ne.s32.totalorder %s23, %s26
      %p32 = scmp.eq.s32.totalorder %s13, 0
      %p33 = por %p31, %p32
      %p34 = scmp.ne.s32.totalorder %s23, %s26
      %p35 = scmp.eq.s32.totalorder %s18, 1
      %p36 = por %p34, %p35
      %p37 = scmp.ne.s32.totalorder %s26, %s27
      %p38 = scmp.eq.s32.totalorder %s18, 0
      %p39 = por %p37, %p38
      %p40 = scmp.ne.s32.totalorder %s26, %s27
      %p41 = scmp.eq.s32.totalorder %s19, 1
      %p42 = por %p40, %p41
      %p44 = scmp.ne.s32.totalorder %s27, %s43
      %p45 = scmp.eq.s32.totalorder %s19, 0
      %p46 = por %p44, %p45
      %s47 = ssub.s32 %s13, %s20
      %p48 = scmp.eq.s32.totalorder %s47, 0
      %s50 = sadd.s32 %s49, 1
      %s51 = scalar_select %p48, %s49, %s50
      %p54 = pneg %p48
      %p55 = scmp.eq.s32.totalorder %s13, 1
      %p56 = por %p54, %p55
      %p57 = scmp.ne.s32.totalorder %s49, %s52
      %p58 = scmp.eq.s32.totalorder %s13, 0
      %p59 = por %p57, %p58
      %p60 = scmp.ne.s32.totalorder %s49, %s52
      %p61 = scmp.eq.s32.totalorder %s18, 1
      %p62 = por %p60, %p61
      %p63 = scmp.ne.s32.totalorder %s52, %s53
      %p64 = scmp.eq.s32.totalorder %s18, 0
      %p65 = por %p63, %p64
      %p66 = scmp.ne.s32.totalorder %s52, %s53
      %p67 = scmp.eq.s32.totalorder %s19, 1
      %p68 = por %p66, %p67
      %p70 = scmp.ne.s32.totalorder %s53, %s69
      %p71 = scmp.eq.s32.totalorder %s19, 0
      %p72 = por %p70, %p71
      %s74 = sadd.s32 %s73, 1
      %p77 = scmp.eq.s32.totalorder %s13, 1
      %p78 = scmp.ne.s32.totalorder %s73, %s75
      %p79 = scmp.eq.s32.totalorder %s13, 0
      %p80 = por %p78, %p79
      %p81 = scmp.ne.s32.totalorder %s73, %s75
      %p82 = scmp.eq.s32.totalorder %s18, 1
      %p83 = por %p81, %p82
      %p84 = scmp.ne.s32.totalorder %s75, %s76
      %p85 = scmp.eq.s32.totalorder %s18, 0
      %p86 = por %p84, %p85
      %p87 = scmp.ne.s32.totalorder %s75, %s76
      %p88 = scmp.eq.s32.totalorder %s19, 1
      %p89 = por %p87, %p88
      %p91 = scmp.ne.s32.totalorder %s76, %s90
      %p92 = scmp.eq.s32.totalorder %s19, 0
      %p93 = por %p91, %p92
      %s95 = sadd.s32 %s94, 1
      %p98 = scmp.eq.s32.totalorder %s13, 1
      %p99 = scmp.ne.s32.totalorder %s94, %s96
      %p100 = scmp.eq.s32.totalorder %s13, 0
      %p101 = por %p99, %p100
      %p102 = scmp.ne.s32.totalorder %s94, %s96
      %p103 = scmp.eq.s32.totalorder %s18, 1
      %p104 = por %p102, %p103
      %p105 = scmp.ne.s32.totalorder %s96, %s97
      %p106 = scmp.eq.s32.totalorder %s18, 0
      %p107 = por %p105, %p106
      %p108 = scmp.ne.s32.totalorder %s96, %s97
      %p109 = scmp.eq.s32.totalorder %s19, 1
      %p110 = por %p108, %p109
      %p112 = scmp.ne.s32.totalorder %s97, %s111
      %p113 = scmp.eq.s32.totalorder %s19, 0
      %p114 = por %p112, %p113
      %s115 = ssub.s32 %s13, %s20
      %p116 = scmp.eq.s32.totalorder %s115, 0
      %s118 = sadd.s32 %s117, 1
      %s119 = scalar_select %p116, %s117, %s118
      %p122 = pneg %p116
      %p123 = scmp.eq.s32.totalorder %s13, 1
      %p124 = por %p122, %p123
      %p125 = scmp.ne.s32.totalorder %s117, %s120
      %p126 = scmp.eq.s32.totalorder %s13, 0
      %p127 = por %p125, %p126
      %p128 = scmp.ne.s32.totalorder %s117, %s120
      %p129 = scmp.eq.s32.totalorder %s18, 1
      %p130 = por %p128, %p129
      %p131 = scmp.ne.s32.totalorder %s120, %s121
      %p132 = scmp.eq.s32.totalorder %s18, 0
      %p133 = por %p131, %p132
      %p134 = scmp.ne.s32.totalorder %s120, %s121
      %p135 = scmp.eq.s32.totalorder %s19, 1
      %p136 = por %p134, %p135
      %p138 = scmp.ne.s32.totalorder %s121, %s137
      %p139 = scmp.eq.s32.totalorder %s19, 0
      %p140 = por %p138, %p139
      %p141 = scmp.le.s32.totalorder 1, %s13
      %p142 = scmp.lt.s32.totalorder %s13, 3
      %p143 = pnand %p141, %p142
      %p144 = pneg %p143
      // Predicated region
      $region9: #{tpu_custom_call.1} parent=5 // pred_check
        _
      $region10: #{tpu_custom_call.1} parent=5 // pred_check_branch
        %146 = sbr.rel (%p143) target = $region12
      $region11: #{tpu_custom_call.1} parent=5 // pred_region
        %s147 = ssub.s32 %s13, 1
        // Predicated region
        $region13: #{tpu_custom_call.1} parent=11 // pred_check
          %p148 = pneg %p86
        $region14: #{tpu_custom_call.1} parent=11 // pred_check_branch
          %150 = sbr.rel (%p148) target = $region16
        $region15: #{tpu_custom_call.1} parent=11 // pred_region
          _
        $region16: #{tpu_custom_call.1} parent=11 // pred_fallthru
          _
        // Predicated region
        $region17: #{tpu_custom_call.1} parent=11 // pred_check
          %p151 = pneg %p107
        $region18: #{tpu_custom_call.1} parent=11 // pred_check_branch
          %153 = sbr.rel (%p151) target = $region20
        $region19: #{tpu_custom_call.1} parent=11 // pred_region
          _
        $region20: #{tpu_custom_call.1} parent=11 // pred_fallthru
          _
      $region12: #{tpu_custom_call.1} parent=5 // pred_fallthru
        _
      %p154 = scmp.lt.s32.totalorder %s13, 2
      // Predicated region
      $region21: #{tpu_custom_call.1} parent=5 // pred_check
        %p155 = pneg %p154
      $region22: #{tpu_custom_call.1} parent=5 // pred_check_branch
        %157 = sbr.rel (%p155) target = $region24
      $region23: #{tpu_custom_call.1} parent=5 // pred_region
        // Predicated region
        $region25: #{tpu_custom_call.1} parent=23 // pred_check
          %p158 = pneg %p33
        $region26: #{tpu_custom_call.1} parent=23 // pred_check_branch
          %160 = sbr.rel (%p158) target = $region28
        $region27: #{tpu_custom_call.1} parent=23 // pred_region
          %p161 = scmp.lt.s32.totalorder %s13, 1
          %s162 = scalar_select %p161, %s13, 1
          %s163 = smul.addr %s162, 8
          %s164 = scalar_lea.vmem %s0, %s163
        $region28: #{tpu_custom_call.1} parent=23 // pred_fallthru
          _
        // Predicated region
        $region29: #{tpu_custom_call.1} parent=23 // pred_check
          %p165 = pneg %p59
        $region30: #{tpu_custom_call.1} parent=23 // pred_check_branch
          %167 = sbr.rel (%p165) target = $region32
        $region31: #{tpu_custom_call.1} parent=23 // pred_region
          %p168 = scmp.lt.s32.totalorder %s13, 1
          %s169 = scalar_select %p168, %s13, 1
          %s170 = smul.addr %s169, 8
          %s171 = scalar_lea.vmem %s1, %s170
        $region32: #{tpu_custom_call.1} parent=23 // pred_fallthru
          _
      $region24: #{tpu_custom_call.1} parent=5 // pred_fallthru
        _
      %p172 = scmp.le.s32.totalorder 1, %s13
      %p173 = scmp.lt.s32.totalorder %s13, 3
      %p174 = pnand %p172, %p173
      %p175 = pneg %p174
      // Predicated region
      $region33: #{tpu_custom_call.1} parent=5 // pred_check
        _
      $region34: #{tpu_custom_call.1} parent=5 // pred_check_branch
        %177 = sbr.rel (%p174) target = $region36
      $region35: #{tpu_custom_call.1} parent=5 // pred_region
        %s178 = ssub.s32 %s13, 1
        %p179 = scmp.lt.s32.totalorder %s18, 1
        %s180 = scalar_select %p179, %s18, 1
        %s181 = smul.addr %s180, 8
        %s182 = scalar_lea.vmem %s0, %s181
        %p183 = pneg %p39
        %p184 = pneg %p36
        %p185 = scmp.lt.s32.totalorder %s18, 1
        %s186 = scalar_select %p185, %s18, 1
        %s187 = smul.addr %s186, 8
        %s188 = scalar_lea.vmem %s1, %s187
        %p189 = pneg %p65
        %p190 = pneg %p62
        %p191 = pneg %p86
        %p192 = pneg %p83
        %p193 = pneg %p107
        %p194 = pneg %p104
        %p195 = pneg %p133
        %p196 = pneg %p130
        %s197 = sand.u32 %s120, 1
        %s198 = scalar_lea.sflag [#allocation3], %s197
        %s199 = sand.u32 %s120, 1
        %s200 = smul.addr %s199, 8
        %s201 = scalar_lea.vmem [#allocation2], %s200
        %p202 = scmp.lt.s32.totalorder %s18, 1
        %s203 = scalar_select %p202, %s18, 1
        %s204 = smul.addr %s203, 8
        %s205 = scalar_lea.vmem %s0, %s204
        %p206 = scmp.lt.s32.totalorder %s18, 1
        %s207 = scalar_select %p206, %s18, 1
        %s208 = smul.addr %s207, 8
        %s209 = scalar_lea.vmem %s1, %s208
        %v211 = vld [vmem:[%s209] sm:$0xff]
        %vm212 = vcmask 56320
        %v213 = vsel %vm212, %v211, -inf
        %214 = vmax.xlane.f32.xlu0 %v213
        %v215 = vpop.xlane.xlu0 %214
        %v216 = vsub.f32 %v211, %v215
        %v217 = vmul.f32 %v216, 1.442695
        %v218 = vpow.pop %v217
        %v219 = vsel %vm212, %v218, 0.0
        %220 = vadd.xlane.f32.xlu0 %v219
        %v221 = vpop.xlane.xlu0 %220
        %v222 = vrcp.pop %v221
        %v223 = vmul.f32 %v218, %v222
        %v224 = vpack.c.bf16 %v223, %v223
        %v225 = vld [vmem:[%s2] sm:$0xf]
        %v227 = vsel %vm212, %v224, 0
        %vm229 = vcmask 1042432
        %vm230 = vcmask 1043456
        %v231 = vsel %vm229, 4294967295, 65535
        %v232 = vsel %vm230, %v231, 0
        %v234 = vand.u32 %v225, %v232
        %236 = vmatprep.subr.bf16.mxu0 0
        %237 = vmatpush1.bf16.msra.mxu0 %v234
        %238 = vmatprep.subr.bf16.mxu0 0
        %239 = vmatpush1.bf16.msra.mxu0 0
        %240 = vmatprep.subr.bf16.mxu0 0
        %241 = vmatpush1.bf16.msra.mxu0 0
        %242 = vmatprep.subr.bf16.mxu0 0
        %243 = vmatpush1.bf16.msra.mxu0 0
        %244 = vmatprep.subr.bf16.mxu0 0
        %245 = vmatpush1.bf16.msra.mxu0 0
        %246 = vmatprep.subr.bf16.mxu0 0
        %247 = vmatpush1.bf16.msra.mxu0 0
        %248 = vmatprep.subr.bf16.mxu0 0
        %249 = vmatpush1.bf16.msra.mxu0 0
        %250 = vmatprep.subr.bf16.mxu0 0
        %251 = vmatpush1.bf16.msra.mxu0 0
        %252 = vmatprep.subr.bf16.mxu0 0
        %253 = vmatpush1.bf16.msra.mxu0 0
        %254 = vmatprep.subr.bf16.mxu0 0
        %255 = vmatpush1.bf16.msra.mxu0 0
        %256 = vmatprep.subr.bf16.mxu0 0
        %257 = vmatpush1.bf16.msra.mxu0 0
        %258 = vmatprep.subr.bf16.mxu0 0
        %259 = vmatpush1.bf16.msra.mxu0 0
        %260 = vmatprep.subr.bf16.mxu0 0
        %261 = vmatpush1.bf16.msra.mxu0 0
        %262 = vmatprep.subr.bf16.mxu0 0
        %263 = vmatpush1.bf16.msra.mxu0 0
        %264 = vmatprep.subr.bf16.mxu0 0
        %265 = vmatpush1.bf16.msra.mxu0 0
        %266 = vmatprep.subr.bf16.mxu0 0
        %267 = vmatpush1.bf16.msra.mxu0 0
        %268 = vmatprep.mubr.bf16.mxu0 0
        %269 = vmatmul.mubr.bf16.gmra.mrb[0].mxu0 %v227
        %v270 = vpop.f32.mrb[0].mxu0
        %v271 = vadd.f32 0.0, %v270
        %v272 = vpop.f32.mrb[0].mxu0
        %v273 = vpop.f32.mrb[0].mxu0
        %v274 = vpop.f32.mrb[0].mxu0
        %275 = vdwg.mxu0
        %v276 = vsub.f32 3.0, %v271
        %v277 = vld [vmem:[%s205] sm:$0xff]
        %v278 = vld [vmem:[%s3] sm:$0xff]
        %v279 = vld [vmem:[%s3 + $0x8] sm:$0x1]
        %281 = vset.pattern.permute.xlu0 0
        %282 = vperm.xlu0 %281, %v277
        %v283 = vpop.permute.xlu0 %282
        %v285 = vlaneseq
        %v286 = vshrl.u32 %v285, 7
        %v287 = vsub.s32 0, %v286
        %v288 = vrot.slane %v278, %v287
        %v289 = vsub.f32 %v283, %v288
        %v290 = vand.u32 2147483647, %v289
        %291 = vset.pattern.permute.xlu0 1
        %292 = vperm.xlu0 %291, %v277
        %v293 = vpop.permute.xlu0 %292
        %v295 = vlaneseq
        %v296 = vshrl.u32 %v295, 7
        %v297 = vsub.s32 1, %v296
        %v298 = vrot.slane %v278, %v297
        %v299 = vsub.f32 %v293, %v298
        %v300 = vand.u32 2147483647, %v299
        %v301 = vadd.f32 %v290, %v300
        %302 = vset.pattern.permute.xlu0 2
        %303 = vperm.xlu0 %302, %v277
        %v304 = vpop.permute.xlu0 %303
        %v306 = vlaneseq
        %v307 = vshrl.u32 %v306, 7
        %v308 = vsub.s32 2, %v307
        %v309 = vrot.slane %v278, %v308
        %v310 = vsub.f32 %v304, %v309
        %v311 = vand.u32 2147483647, %v310
        %v312 = vadd.f32 %v301, %v311
        %313 = vset.pattern.permute.xlu0 3
        %314 = vperm.xlu0 %313, %v277
        %v315 = vpop.permute.xlu0 %314
        %v317 = vlaneseq
        %v318 = vshrl.u32 %v317, 7
        %v319 = vsub.s32 3, %v318
        %v320 = vrot.slane %v278, %v319
        %v321 = vsub.f32 %v315, %v320
        %v322 = vand.u32 2147483647, %v321
        %v323 = vadd.f32 %v312, %v322
        %v324 = vadd.f32 %v276, %v323
        %v325 = vmul.f32 %v277, 0.5
        %327 = vrot.lane.b32.xlu0 %v325, 126
        %v328 = vpop.permute.xlu0 %327
        %v330 = vsub.f32 %v277, %v328
        %v331 = vadd.f32 %v277, %v328
        %332 = vrot.lane.b32.xlu0 %v277, 127
        %v333 = vpop.permute.xlu0 %332
        %v335 = vmul.f32 %v277, %v333
        %337 = vset.pattern.permute.xlu0 0
        %338 = vperm.xlu0 %337, %v331
        %v339 = vpop.permute.xlu0 %338
        %v341 = vlaneseq
        %v342 = vshrl.u32 %v341, 7
        %v343 = vsub.s32 6, %v342
        %v344 = vrot.slane %v278, %v343
        %v345 = vmin.f32 %v339, %v344
        %347 = vset.pattern.permute.xlu0 0
        %348 = vperm.xlu0 %347, %v330
        %v349 = vpop.permute.xlu0 %348
        %v351 = vlaneseq
        %v352 = vshrl.u32 %v351, 7
        %v353 = vsub.s32 4, %v352
        %v354 = vrot.slane %v278, %v353
        %v355 = vmax.f32 %v349, %v354
        %v356 = vsub.f32 %v345, %v355
        %v357 = vmax.f32 %v356, 0.0
        %358 = vset.pattern.permute.xlu0 1
        %359 = vperm.xlu0 %358, %v331
        %v360 = vpop.permute.xlu0 %359
        %v362 = vlaneseq
        %v363 = vshrl.u32 %v362, 7
        %v364 = vsub.s32 7, %v363
        %v365 = vrot.slane %v278, %v364
        %v366 = vmin.f32 %v360, %v365
        %367 = vset.pattern.permute.xlu0 1
        %368 = vperm.xlu0 %367, %v330
        %v369 = vpop.permute.xlu0 %368
        %v371 = vlaneseq
        %v372 = vshrl.u32 %v371, 7
        %v373 = vsub.s32 5, %v372
        %v374 = vrot.slane %v278, %v373
        %v375 = vmax.f32 %v369, %v374
        %v376 = vsub.f32 %v366, %v375
        %v377 = vmax.f32 %v376, 0.0
        %v378 = vmul.f32 %v357, %v377
        %380 = vset.pattern.permute.xlu0 2
        %381 = vperm.xlu0 %380, %v335
        %v382 = vpop.permute.xlu0 %381
        %v384 = vlaneseq
        %v385 = vshrl.u32 %v384, 7
        %v386 = vsub.s32 0, %v385
        %v387 = vrot.slane %v279, %v386
        %v388 = vadd.f32 %v382, %v387
        %v389 = vsub.f32 %v388, %v378
        %v390 = vmax.f32 %v339, %v344
        %v391 = vmin.f32 %v349, %v354
        %v392 = vsub.f32 %v390, %v391
        %v393 = vmax.f32 %v360, %v365
        %v394 = vmin.f32 %v369, %v374
        %v395 = vsub.f32 %v393, %v394
        %v396 = vmul.f32 %v392, %v395
        %v397 = vmax.f32 %v389, 1e-12
        %v398 = vrcp.pop %v397
        %v399 = vmax.f32 %v396, 1e-12
        %v400 = vrcp.pop %v399
        %v401 = vmul.f32 %v378, %v398
        %v402 = vmul.f32 %v389, %v400
        %v403 = vadd.f32 %v401, %v402
        %v404 = vsub.f32 %v324, %v403
        %405 = vst [vmem:[%s201] sm:$0xff] %v404
        %s406 = sand.u32 %s120, 1
        %s407 = scalar_lea.sflag [#allocation3], %s406
        %s408 = sand.u32 %s120, 1
        %s409 = smul.addr %s408, 8
        %s410 = scalar_lea.vmem [#allocation2], %s409
        // Predicated region
        $region37: #{tpu_custom_call.1} parent=35 // pred_check
          %p411 = pneg %p130
        $region38: #{tpu_custom_call.1} parent=35 // pred_check_branch
          %413 = sbr.rel (%p411) target = $region40
        $region39: #{tpu_custom_call.1} parent=35 // pred_region
          %s415 = ssub.s32 128, 128
          %416 = vsyncadd %s407, %s415
          %s417 = smul.addr %s18, 128
          %s418 = scalar_lea.hbm %s4, %s417
          %s420 = sshll.u32 %s410, 4
          %s421 = int_to_ptr.vmem [resolvable:$true] %s420
          %423 = dma.vmem_to_hbm [thread:$0]  %s421, 128, %s418, %s407
        $region40: #{tpu_custom_call.1} parent=35 // pred_fallthru
          _
      $region36: #{tpu_custom_call.1} parent=5 // pred_fallthru
        _
      %p424 = scmp.le.s32.totalorder 2, %s13
      // Predicated region
      $region41: #{tpu_custom_call.1} parent=5 // pred_check
        %p425 = pneg %p424
      $region42: #{tpu_custom_call.1} parent=5 // pred_check_branch
        %427 = sbr.rel (%p425) target = $region44
      $region43: #{tpu_custom_call.1} parent=5 // pred_region
        %s428 = ssub.s32 %s13, 2
        // Predicated region
        $region45: #{tpu_custom_call.1} parent=43 // pred_check
          %p429 = pneg %p136
        $region46: #{tpu_custom_call.1} parent=43 // pred_check_branch
          %431 = sbr.rel (%p429) target = $region48
        $region47: #{tpu_custom_call.1} parent=43 // pred_region
          %s432 = sand.u32 %s121, 1
          %s433 = scalar_lea.sflag [#allocation3], %s432
          %s434 = sand.u32 %s121, 1
          %s435 = smul.addr %s434, 8
          %s436 = scalar_lea.vmem [#allocation2], %s435
          %437 = dma.done %s433, 128
        $region48: #{tpu_custom_call.1} parent=43 // pred_fallthru
          _
      $region44: #{tpu_custom_call.1} parent=5 // pred_fallthru
        _
    $region6: #{tpu_custom_call.1} parent=1 // loop_footer
      %s17 = sadd.s32 1, %s13
    $region7: #{tpu_custom_call.1} parent=1 // loop_footer_branch
      %12 = sbr.rel target = $region3
    $region8: #{tpu_custom_call.1} parent=1 // loop_exit
      _
    %438 = vsyncpa [#allocation3], 1
    %s439 = scalar_lea.sflag [#allocation3], 1
    %440 = vsyncpa %s439, 1

</llo_original>
